<compile_context>
chip_gen: v5e
topology: v5e:2x2
jax: 0.10.0
libtpu: 0.0.40
codegen_flags: <defaults>
</compile_context>

<pallas_src>
import numpy as np
import jax
import jax.numpy as jnp
from jax.experimental import pallas as pl
from jax.experimental.pallas import tpu as pltpu


def _fused_relu_double_permute_kernel(x_ref, p_ref, o_ref):
    """o = (2 * relu(x)) @ P   -- VPU elementwise + MXU one-hot permutation."""
    y = 2.0 * jnp.maximum(x_ref[...], 0.0)
    o_ref[...] = jnp.dot(
        y,
        p_ref[...],
        preferred_element_type=jnp.float32,
        precision=jax.lax.Precision.HIGHEST,
    ).astype(o_ref.dtype)


def _permutation_matrix(C: int, W: int) -> np.ndarray:
    """One-hot matrix for: out[b, j, i] = x[b, (i*W + j) % C, (i*W + j) // C].

    Flat (row-major) indices:  out_flat[p] = x_flat[q(p)],  p = j*C + i,
    k = i*W + j,  q = (k % C) * W + (k // C).
    """
    N = C * W
    p = np.arange(N)
    j, i = p // C, p % C
    k = i * W + j
    q = (k % C) * W + (k // C)
    pmat = np.zeros((N, N), dtype=np.float32)
    pmat[q, p] = 1.0
    return pmat


def model_forward(x, y=None, z=None):
    """Mirrors Model.forward(x, y, z); y and z are unused (overwritten in torch code)."""
    B, C, W = x.shape
    N = C * W

    # Free, layout-preserving reshape (no HBM copy for a contiguous row-major array).
    x_flat = x.reshape(B, N)
    pmat = jnp.asarray(_permutation_matrix(C, W))

    # Batch tiling: full batch at toy sizes; (8-multiple) row tiles when B grows,
    # so the grid axis can be sharded across TensorCores / pipelined.
    TB = B
    if B >= 16 and B % 8 == 0:
        TB = min(B, 1024)
        while B % TB:
            TB //= 2
    grid = (B // TB,)

    out_flat = pl.pallas_call(
        _fused_relu_double_permute_kernel,
        out_shape=jax.ShapeDtypeStruct((B, N), x.dtype),
        grid=grid,
        in_specs=[
            pl.BlockSpec((TB, N), lambda b: (b, 0)),   # lane-dense flattened rows
            pl.BlockSpec((N, N), lambda b: (0, 0)),    # permutation matrix (resident)
        ],
        out_specs=pl.BlockSpec((TB, N), lambda b: (b, 0)),
        compiler_params=pltpu.CompilerParams(
            dimension_semantics=("parallel",),          # lets v7x use both TCs; no-op on v5e/v6e
            vmem_limit_bytes=32 * 1024 * 1024,          # explicit headroom (v7x has 64 MiB VMEM)
        ),
    )(x_flat, pmat)

    # Free reshape back to the logical (B, W, C) result.
    return out_flat.reshape(B, W, C)


def _reference(x):
    z1 = jnp.maximum(jnp.swapaxes(x, 1, 2), 0.0)                # transpose + relu
    z2 = z1.reshape(x.shape[0], x.shape[1], -1)                 # view(B, C, -1)
    z3 = jnp.swapaxes(z2, 1, 2)                                 # transpose(1, 2)
    yy = jnp.maximum(z3, 0.0)                                   # relu
    return yy + yy


if __name__ == "__main__":
    key = jax.random.PRNGKey(0)
    kx, ky, kz = jax.random.split(key, 3)
    x = jax.random.normal(kx, (2, 3, 4), dtype=jnp.float32)
    y = jax.random.normal(ky, (2, 5), dtype=jnp.float32)
    z = jax.random.normal(kz, (2, 3, 4), dtype=jnp.float32)

    out = model_forward(x, y, z)
    jax.block_until_ready(out)

    ref = _reference(x)
    assert out.shape == (2, 4, 3), out.shape
    assert jnp.allclose(out, ref, atol=1e-5, rtol=1e-5), "mismatch vs reference"
    print("KERNEL_OK")
</pallas_src>

<mosaic_0001>
module attributes {stable_mosaic.version = 11 : i64} {
  func.func @_fused_relu_double_permute_kernel(%arg0: i32, %arg1: memref<2x12xf32, #tpu.memory_space<vmem>>, %arg2: memref<12x12xf32, #tpu.memory_space<vmem>>, %arg3: memref<2x12xf32, #tpu.memory_space<vmem>>) attributes {dimension_semantics = [#tpu.dimension_semantics<parallel>], iteration_bounds = array<i64: 1>, scalar_prefetch = 0 : i64, scratch_operands = 0 : i64, tpu.core_type = #tpu.core_type<tc>, window_params = [{transform_indices = @transform_0, window_bounds = array<i64: 2, 12>}, {pipeline_mode = #tpu.pipeline_mode<synchronous>, transform_indices = @transform_1, window_bounds = array<i64: 12, 12>}, {transform_indices = @transform_2, window_bounds = array<i64: 2, 12>}]} {
    %c0 = arith.constant 0 : index
    %c0_0 = arith.constant 0 : index
    %0 = vector.load %arg1[%c0, %c0_0] : memref<2x12xf32, #tpu.memory_space<vmem>>, vector<2x12xf32>
    %cst = arith.constant 0.000000e+00 : f32
    %1 = vector.broadcast %cst : f32 to vector<2x12xf32>
    %2 = arith.maximumf %0, %1 : vector<2x12xf32>
    %cst_1 = arith.constant 2.000000e+00 : f32
    %3 = vector.broadcast %cst_1 : f32 to vector<2x12xf32>
    %4 = arith.mulf %3, %2 : vector<2x12xf32>
    %c0_2 = arith.constant 0 : index
    %c0_3 = arith.constant 0 : index
    %5 = vector.load %arg2[%c0_2, %c0_3] : memref<12x12xf32, #tpu.memory_space<vmem>>, vector<12x12xf32>
    %cst_4 = arith.constant dense<0.000000e+00> : vector<2x12xf32>
    %6 = tpu.matmul %4, %5, %cst_4 {dimension_numbers = #tpu.dot_dimension_numbers<[1], [0], [0], [1], [0, 0, 1, 1], [], []>, precision = #tpu.contract_precision<fp32>} : vector<2x12xf32>, vector<12x12xf32>, vector<2x12xf32> -> vector<2x12xf32>
    %c0_5 = arith.constant 0 : index
    %c0_6 = arith.constant 0 : index
    %7 = vector.load %arg3[%c0_5, %c0_6] : memref<2x12xf32, #tpu.memory_space<vmem>>, vector<2x12xf32>
    tpu.vector_store %arg3[%c0_5, %c0_6], %6 {strides = array<i32>} : memref<2x12xf32, #tpu.memory_space<vmem>>, vector<2x12xf32>,
    return
  }
  func.func @transform_0(%arg0: i32) -> (i32, i32) {
    %c0_i32 = arith.constant 0 : i32
    %c0_i32_0 = arith.constant 0 : i32
    return %arg0, %c0_i32 : i32, i32
  }
  func.func @transform_1(%arg0: i32) -> (i32, i32) {
    %c0_i32 = arith.constant 0 : i32
    %c0_i32_0 = arith.constant 0 : i32
    %c0_i32_1 = arith.constant 0 : i32
    return %c0_i32, %c0_i32_0 : i32, i32
  }
  func.func @transform_2(%arg0: i32) -> (i32, i32) {
    %c0_i32 = arith.constant 0 : i32
    %c0_i32_0 = arith.constant 0 : i32
    return %arg0, %c0_i32 : i32, i32
  }
}

</mosaic_0001>

<llo_original>
// kernel: tpu_custom_call.1
$region0: #{tpu_custom_call.1}
  #allocation0 [shape = 'u32[]', space=smem, size = 0x4, offset = 0x4, fixed_abs, tag = 'smem constant byte address 0x4 - core index']
  #allocation1 [shape = 'u32[72,128]{1,0:T(1,128)}', space=vmem, size = 0x9000, scoped, tag = 'internal scratch']
  %s0 = inlined_call_operand.hbm [shape: f32[2,12], index: 0, kind: input, shape index: {}]
  %s1 = inlined_call_operand.hbm [shape: f32[12,12], index: 1, kind: input, shape index: {}]
  %s2 = inlined_call_operand.hbm [shape: f32[2,12], index: 2, kind: output, shape index: {}]
  %s3 = sld [smem:[#allocation0]]
  $region26: #{tpu_custom_call.1} parent=0
    _
  %s5 = ssub.s32 1, %s3
  %s6 = scalar_select 0, %s5, %s3
  $region1: #{tpu_custom_call.1} parent=0
    #allocation2 [shape = 'u8[1024]{0}', space=vmem, size = 0x400, scoped, tag = 'input window, operand 0, single buffered']
    #allocation3 [shape = 's32[1]{0}', space=sflag, size = 0x4, scoped, tag = 'scoped memory for tpu_custom_call.1']
    #allocation4 [shape = 's32[1]{0}', space=sflag, size = 0x4, scoped, tag = 'scoped memory for tpu_custom_call.1']
    #allocation5 [shape = 'u8[8192]{0}', space=vmem, size = 0x2000, scoped, tag = 'input window, operand 1, single buffered']
    #allocation6 [shape = 's32[1]{0}', space=sflag, size = 0x4, scoped, tag = 'scoped memory for tpu_custom_call.1']
    #allocation7 [shape = 'u8[1024]{0}', space=vmem, size = 0x400, scoped, tag = 'output window, operand 0, single buffered']
    %7 = vsyncpa [#allocation3], 0
    %8 = vsyncpa [#allocation6], 0
    %9 = vsyncpa [#allocation4], 0
    // Predicated region
    $region2: #{tpu_custom_call.1} parent=1 // pred_check
      _
    $region3: #{tpu_custom_call.1} parent=1 // pred_check_branch
      %11 = sbr.rel (0) target = $region5
    $region4: #{tpu_custom_call.1} parent=1 // pred_region
      %13 = vsyncadd [#allocation3], 0
      %s15 = sshll.u32 %s0, 4
      %s16 = int_to_ptr.hbm [resolvable:$true] %s15
      %s17 = sshll.u32 [#allocation2], 4
      %s18 = int_to_ptr.vmem [resolvable:$true] %s17
      %20 = dma.hbm_to_vmem [thread:$0]  %s16, 32, %s18, [#allocation3]
    $region5: #{tpu_custom_call.1} parent=1 // pred_fallthru
      _
    // Predicated region
    $region6: #{tpu_custom_call.1} parent=1 // pred_check
      _
    $region7: #{tpu_custom_call.1} parent=1 // pred_check_branch
      %22 = sbr.rel (0) target = $region9
    $region8: #{tpu_custom_call.1} parent=1 // pred_region
      %24 = vsyncadd [#allocation6], 0
      %s25 = sshll.u32 %s1, 4
      %s26 = int_to_ptr.hbm [resolvable:$true] %s25
      %s27 = sshll.u32 [#allocation5], 4
      %s28 = int_to_ptr.vmem [resolvable:$true] %s27
      %33 = dma.hbm_to_vmem [thread:$0]  %s26, 256, %s28, [#allocation6], 128, 128, 8
    $region9: #{tpu_custom_call.1} parent=1 // pred_fallthru
      _
    // Predicated region
    $region10: #{tpu_custom_call.1} parent=1 // pred_check
      _
    $region11: #{tpu_custom_call.1} parent=1 // pred_check_branch
      %35 = sbr.rel (0) target = $region13
    $region12: #{tpu_custom_call.1} parent=1 // pred_region
      %37 = dma.done [#allocation3], 32
    $region13: #{tpu_custom_call.1} parent=1 // pred_fallthru
      _
    // Predicated region
    $region14: #{tpu_custom_call.1} parent=1 // pred_check
      _
    $region15: #{tpu_custom_call.1} parent=1 // pred_check_branch
      %39 = sbr.rel (0) target = $region17
    $region16: #{tpu_custom_call.1} parent=1 // pred_region
      %41 = dma.done [#allocation6], 256
    $region17: #{tpu_custom_call.1} parent=1 // pred_fallthru
      _
    %v42 = vld [vmem:[#allocation2] sm:$0x3]
    %v43 = vmax.f32 %v42, 0.0
    %v44 = vmul.f32 %v43, 2.0
    %v45 = vld [vmem:[#allocation5] sm:$0xff]
    %v46 = vld [vmem:[#allocation5 + $0x8] sm:$0xf]
    %vm47 = vcmask 97280
    %v49 = vsel %vm47, %v44, 0
    %vm51 = vcmask 1043456
    %v53 = vsel %vm51, %v46, 0
    %55 = vmatpush.msra.mxu0 0.0
    %56 = vmatpush.msra.mxu0 0.0
    %57 = vmatpush.msra.mxu0 0.0
    %58 = vmatpush.msra.mxu0 0.0
    %59 = vmatpush.msra.mxu0 0.0
    %60 = vmatpush.msra.mxu0 0.0
    %61 = vmatpush.msra.mxu0 0.0
    %62 = vmatpush.msra.mxu0 0.0
    %63 = vmatpush.msra.mxu0 0.0
    %64 = vmatpush.msra.mxu0 0.0
    %65 = vmatpush.msra.mxu0 0.0
    %66 = vmatpush.msra.mxu0 0.0
    %67 = vmatpush.msra.mxu0 0.0
    %68 = vmatpush.msra.mxu0 0.0
    %v69 = vand.u32 %v53, 4294901760
    %70 = vmatpush.msra.mxu0 %v69
    %v71 = vand.u32 %v45, 4294901760
    %72 = vmatpush.msra.mxu0 %v71
    %v73 = vand.u32 %v49, 4294901760
    %v74 = vsub.f32 %v49, %v73
    %v75 = vand.u32 %v74, 4294901760
    %v76 = vsub.f32 %v74, %v75
    %v77 = vand.u32 %v76, 4294901760
    %78 = vmatmul.f32.gmra.mxu0 %v77
    %v79 = vpop.f32.mrf.mxu0
    %v80 = vadd.f32 0.0, %v79
    %81 = vdwg.mxu0
    %82 = vmatpush.msra.mxu0 0.0
    %83 = vmatpush.msra.mxu0 0.0
    %84 = vmatpush.msra.mxu0 0.0
    %85 = vmatpush.msra.mxu0 0.0
    %86 = vmatpush.msra.mxu0 0.0
    %87 = vmatpush.msra.mxu0 0.0
    %88 = vmatpush.msra.mxu0 0.0
    %89 = vmatpush.msra.mxu0 0.0
    %90 = vmatpush.msra.mxu0 0.0
    %91 = vmatpush.msra.mxu0 0.0
    %92 = vmatpush.msra.mxu0 0.0
    %93 = vmatpush.msra.mxu0 0.0
    %94 = vmatpush.msra.mxu0 0.0
    %95 = vmatpush.msra.mxu0 0.0
    %v96 = vand.u32 %v53, 4294901760
    %v97 = vsub.f32 %v53, %v96
    %v98 = vand.u32 %v97, 4294901760
    %v99 = vsub.f32 %v97, %v98
    %v100 = vand.u32 %v99, 4294901760
    %101 = vmatpush.msra.mxu0 %v100
    %v102 = vand.u32 %v45, 4294901760
    %v103 = vsub.f32 %v45, %v102
    %v104 = vand.u32 %v103, 4294901760
    %v105 = vsub.f32 %v103, %v104
    %v106 = vand.u32 %v105, 4294901760
    %107 = vmatpush.msra.mxu0 %v106
    %v108 = vand.u32 %v49, 4294901760
    %109 = vmatmul.f32.gmra.mxu0 %v108
    %v110 = vpop.f32.mrf.mxu0
    %v111 = vadd.f32 %v80, %v110
    %112 = vdwg.mxu0
    %113 = vmatpush.msra.mxu0 0.0
    %114 = vmatpush.msra.mxu0 0.0
    %115 = vmatpush.msra.mxu0 0.0
    %116 = vmatpush.msra.mxu0 0.0
    %117 = vmatpush.msra.mxu0 0.0
    %118 = vmatpush.msra.mxu0 0.0
    %119 = vmatpush.msra.mxu0 0.0
    %120 = vmatpush.msra.mxu0 0.0
    %121 = vmatpush.msra.mxu0 0.0
    %122 = vmatpush.msra.mxu0 0.0
    %123 = vmatpush.msra.mxu0 0.0
    %124 = vmatpush.msra.mxu0 0.0
    %125 = vmatpush.msra.mxu0 0.0
    %126 = vmatpush.msra.mxu0 0.0
    %v127 = vand.u32 %v53, 4294901760
    %v128 = vsub.f32 %v53, %v127
    %129 = vmatpush.msra.mxu0 %v128
    %v130 = vand.u32 %v45, 4294901760
    %v131 = vsub.f32 %v45, %v130
    %132 = vmatpush.msra.mxu0 %v131
    %v133 = vand.u32 %v49, 4294901760
    %v134 = vsub.f32 %v49, %v133
    %135 = vmatmul.f32.gmra.mxu0 %v134
    %v136 = vpop.f32.mrf.mxu0
    %v137 = vadd.f32 %v111, %v136
    %138 = vdwg.mxu0
    %139 = vmatpush.msra.mxu0 0.0
    %140 = vmatpush.msra.mxu0 0.0
    %141 = vmatpush.msra.mxu0 0.0
    %142 = vmatpush.msra.mxu0 0.0
    %143 = vmatpush.msra.mxu0 0.0
    %144 = vmatpush.msra.mxu0 0.0
    %145 = vmatpush.msra.mxu0 0.0
    %146 = vmatpush.msra.mxu0 0.0
    %147 = vmatpush.msra.mxu0 0.0
    %148 = vmatpush.msra.mxu0 0.0
    %149 = vmatpush.msra.mxu0 0.0
    %150 = vmatpush.msra.mxu0 0.0
    %151 = vmatpush.msra.mxu0 0.0
    %152 = vmatpush.msra.mxu0 0.0
    %v153 = vand.u32 %v53, 4294901760
    %154 = vmatpush.msra.mxu0 %v153
    %v155 = vand.u32 %v45, 4294901760
    %156 = vmatpush.msra.mxu0 %v155
    %v157 = vand.u32 %v49, 4294901760
    %v158 = vsub.f32 %v49, %v157
    %v159 = vand.u32 %v158, 4294901760
    %160 = vmatmul.f32.gmra.mxu0 %v159
    %v161 = vpop.f32.mrf.mxu0
    %v162 = vadd.f32 %v137, %v161
    %163 = vdwg.mxu0
    %164 = vmatpush.msra.mxu0 0.0
    %165 = vmatpush.msra.mxu0 0.0
    %166 = vmatpush.msra.mxu0 0.0
    %167 = vmatpush.msra.mxu0 0.0
    %168 = vmatpush.msra.mxu0 0.0
    %169 = vmatpush.msra.mxu0 0.0
    %170 = vmatpush.msra.mxu0 0.0
    %171 = vmatpush.msra.mxu0 0.0
    %172 = vmatpush.msra.mxu0 0.0
    %173 = vmatpush.msra.mxu0 0.0
    %174 = vmatpush.msra.mxu0 0.0
    %175 = vmatpush.msra.mxu0 0.0
    %176 = vmatpush.msra.mxu0 0.0
    %177 = vmatpush.msra.mxu0 0.0
    %v178 = vand.u32 %v53, 4294901760
    %v179 = vsub.f32 %v53, %v178
    %v180 = vand.u32 %v179, 4294901760
    %181 = vmatpush.msra.mxu0 %v180
    %v182 = vand.u32 %v45, 4294901760
    %v183 = vsub.f32 %v45, %v182
    %v184 = vand.u32 %v183, 4294901760
    %185 = vmatpush.msra.mxu0 %v184
    %v186 = vand.u32 %v49, 4294901760
    %187 = vmatmul.f32.gmra.mxu0 %v186
    %v188 = vpop.f32.mrf.mxu0
    %v189 = vadd.f32 %v162, %v188
    %190 = vdwg.mxu0
    %191 = vmatpush.msra.mxu0 0.0
    %192 = vmatpush.msra.mxu0 0.0
    %193 = vmatpush.msra.mxu0 0.0
    %194 = vmatpush.msra.mxu0 0.0
    %195 = vmatpush.msra.mxu0 0.0
    %196 = vmatpush.msra.mxu0 0.0
    %197 = vmatpush.msra.mxu0 0.0
    %198 = vmatpush.msra.mxu0 0.0
    %199 = vmatpush.msra.mxu0 0.0
    %200 = vmatpush.msra.mxu0 0.0
    %201 = vmatpush.msra.mxu0 0.0
    %202 = vmatpush.msra.mxu0 0.0
    %203 = vmatpush.msra.mxu0 0.0
    %204 = vmatpush.msra.mxu0 0.0
    %v205 = vand.u32 %v53, 4294901760
    %206 = vmatpush.msra.mxu0 %v205
    %v207 = vand.u32 %v45, 4294901760
    %208 = vmatpush.msra.mxu0 %v207
    %v209 = vand.u32 %v49, 4294901760
    %210 = vmatmul.f32.gmra.mxu0 %v209
    %v211 = vpop.f32.mrf.mxu0
    %v212 = vadd.f32 %v189, %v211
    %213 = vdwg.mxu0
    %vm214 = vcmask 91136
    %215 = vst.msk [vmem:[#allocation7] sm:$0x3] %vm214, %v212
    // Predicated region
    $region18: #{tpu_custom_call.1} parent=1 // pred_check
      _
    $region19: #{tpu_custom_call.1} parent=1 // pred_check_branch
      %217 = sbr.rel (0) target = $region21
    $region20: #{tpu_custom_call.1} parent=1 // pred_region
      %219 = vsyncadd [#allocation4], 0
      %s221 = sshll.u32 [#allocation7], 4
      %s222 = int_to_ptr.vmem [resolvable:$true] %s221
      %s223 = sshll.u32 %s2, 4
      %s224 = int_to_ptr.hbm [resolvable:$true] %s223
      %226 = dma.vmem_to_hbm [thread:$0]  %s222, 32, %s224, [#allocation4]
    $region21: #{tpu_custom_call.1} parent=1 // pred_fallthru
      _
    // Predicated region
    $region22: #{tpu_custom_call.1} parent=1 // pred_check
      _
    $region23: #{tpu_custom_call.1} parent=1 // pred_check_branch
      %228 = sbr.rel (0) target = $region25
    $region24: #{tpu_custom_call.1} parent=1 // pred_region
      %230 = dma.done [#allocation4], 32
    $region25: #{tpu_custom_call.1} parent=1 // pred_fallthru
      _
    %231 = vsyncpa [#allocation3], 1
    %232 = vsyncpa [#allocation6], 1
    %233 = vsyncpa [#allocation4], 1

</llo_original>
